<compile_context>
chip_gen: v5e
topology: v5e:2x2
jax: 0.10.0
libtpu: 0.0.40
codegen_flags: <defaults>
</compile_context>

<pallas_src>
import jax
import jax.numpy as jnp
from jax import lax
from jax.experimental import pallas as pl
from jax.experimental.pallas import tpu as pltpu


MASK_VALUE = -1e30   # finite large-negative mask (avoids -inf -> NaN on fully-masked rows)
EXP_FLOOR = -60.0    # exp(-60) ~ 9e-27: keeps +-1e30 mask values away from the EUP exp


def _round_up(x, m):
    return ((x + m - 1) // m) * m


def _pick_bh_tile(bh, per_head_bytes, shared_bytes, *, vmem_budget_bytes, min_grid_steps):
    """Largest divisor T of `bh` whose double-buffered working set fits the VMEM
    budget, keeping at least `min_grid_steps` grid steps when possible."""
    divisors = [t for t in range(1, bh + 1) if bh % t == 0]
    fits = [t for t in divisors
            if 2 * (t * per_head_bytes + shared_bytes) <= vmem_budget_bytes] or [1]
    stepped = [t for t in fits if bh // t >= min_grid_steps]
    return max(stepped) if stepped else max(fits)


def _make_kernel(*, scale, s_valid, s_pad, has_prev, has_shared, has_kpm, emit_scores):
    n_bias = int(has_prev) + int(has_shared) + int(has_kpm)

    def kernel(*refs):
        q_ref, k_ref, v_ref = refs[0], refs[1], refs[2]
        bias_refs = refs[3:3 + n_bias]
        out_refs = refs[3 + n_bias:]
        out_ref, weights_ref = out_refs[0], out_refs[1]
        scores_ref = out_refs[2] if emit_scores else None

        bi = 0
        prev_ref = shared_ref = kpm_ref = None
        if has_prev:
            prev_ref = bias_refs[bi]; bi += 1
        if has_shared:
            shared_ref = bias_refs[bi]; bi += 1
        if has_kpm:
            kpm_ref = bias_refs[bi]; bi += 1

        q = q_ref[...]            # (T, Q, Dk)  compute dtype (bf16 by default)
        k = k_ref[...]            # (T, Dk, Sp)
        v = v_ref[...]            # (T, Sp, Dv)

        # Batched QK^T on the MXU, f32 accumulation; `scale` is a trace-time constant.
        s = jnp.einsum("tqd,tds->tqs", q, k,
                       preferred_element_type=jnp.float32) * scale

        if has_prev:
            s = s + prev_ref[...]                     # (T, Q, Sp) f32 residual scores / 4-D mask
        if has_shared:
            s = s + shared_ref[...][None, :, :]       # (Q, Sp) shared additive mask
        if has_kpm:
            s = s + kpm_ref[...]                      # (T, 1, Sp) broadcast over Q in-register

        if s_pad > s_valid:                           # mask lane-padding columns
            col = lax.broadcasted_iota(jnp.int32, s.shape, 2)
            s = jnp.where(col < s_valid, s, MASK_VALUE)

        if emit_scores:
            # Early store: shortens the live range of the big f32 block and overlaps
            # the store with the exp/reduce work below.
            scores_ref[...] = s.astype(scores_ref.dtype)

        # Numerically stable softmax over keys.
        m = jnp.max(s, axis=-1, keepdims=True)
        p = jnp.exp(jnp.maximum(s - m, EXP_FLOOR))
        denom = jnp.sum(p, axis=-1, keepdims=True)
        # EUP approximate reciprocal + one Newton step -> full f32 accuracy.
        inv = pl.reciprocal(denom, approx=True)
        inv = inv * (2.0 - denom * inv)
        w = p * inv

        out = jnp.einsum("tqs,tsd->tqd", w.astype(v.dtype), v,
                         preferred_element_type=jnp.float32)
        out_ref[...] = out.astype(out_ref.dtype)
        weights_ref[...] = w.astype(weights_ref.dtype)

    return kernel


def scaled_dot_product_attention(
    queries, keys, values, scaling_factor,
    previous_scores=None, key_padding_mask=None, attention_mask=None,
    residual_attention=False, *,
    compute_dtype=jnp.bfloat16,            # MXU-native operand dtype for both matmuls
    weights_dtype=jnp.float32,             # set bf16 to halve the weights store stream (v5e)
    pad_lanes=True,                        # pad S to a multiple of 128 -> lane-dense stores
    bh_tile=None,
    vmem_budget_bytes=32 * 1024 * 1024,    # ~half of v7x's 64 MiB VMEM; safe everywhere
    min_grid_steps=2,                      # use 4 on v7x (2 TCs), 1 for tiny single-TC problems
):
    B, H, Q, Dk = queries.shape
    S = keys.shape[-1]
    Dv = values.shape[-1]
    BH = B * H
    out_dtype = queries.dtype

    Sp = _round_up(S, 128) if pad_lanes else S
    pad_s = Sp - S

    q = queries.reshape(BH, Q, Dk).astype(compute_dtype)
    k = keys.reshape(BH, Dk, S).astype(compute_dtype)
    v = values.reshape(BH, S, Dv).astype(compute_dtype)
    if pad_s:
        k = jnp.pad(k, ((0, 0), (0, 0), (0, pad_s)))
        v = jnp.pad(v, ((0, 0), (0, pad_s), (0, 0)))

    # ---- optional additive biases, kept as small as possible ----
    prev = None     # (BH, Q, Sp) f32 : residual scores and/or 4-D mask
    shared = None   # (Q, Sp)     f32 : 2-D attention mask, fetched once (VMEM-resident)
    kpm = None      # (BH, 1, Sp) f32 : key-padding mask, broadcast over Q in-kernel

    if previous_scores is not None:
        prev = previous_scores.reshape(BH, Q, S).astype(jnp.float32)

    if attention_mask is not None:
        am = attention_mask
        if am.dtype == jnp.bool_:
            am = jnp.where(am, MASK_VALUE, 0.0).astype(jnp.float32)
        else:
            am = am.astype(jnp.float32)
        if am.ndim <= 2:
            shared = jnp.broadcast_to(am, (Q, S))
        else:  # per-batch / per-head mask, e.g. (B, H, Q, S)
            am = jnp.broadcast_to(am, (B, H, Q, S)).reshape(BH, Q, S)
            prev = am if prev is None else prev + am

    if key_padding_mask is not None:
        kb = jnp.where(key_padding_mask, MASK_VALUE, 0.0).astype(jnp.float32)   # (B, S)
        kpm = jnp.broadcast_to(kb[:, None, :], (B, H, S)).reshape(BH, 1, S)

    if pad_s:
        if prev is not None:
            prev = jnp.pad(prev, ((0, 0), (0, 0), (0, pad_s)))
        if shared is not None:
            shared = jnp.pad(shared, ((0, 0), (0, pad_s)))
        if kpm is not None:
            kpm = jnp.pad(kpm, ((0, 0), (0, 0), (0, pad_s)))

    emit_scores = bool(residual_attention)

    # ---- VMEM-budget-derived BH tile ----
    bc = jnp.dtype(compute_dtype).itemsize
    bw = jnp.dtype(weights_dtype).itemsize
    bo = jnp.dtype(out_dtype).itemsize
    per_head = (Q * Dk + Dk * Sp + Sp * Dv) * bc + Q * Dv * bo + Q * Sp * bw
    if prev is not None:
        per_head += Q * Sp * 4
    if kpm is not None:
        per_head += Sp * 4
    if emit_scores:
        per_head += Q * Sp * 4
    shared_bytes = Q * Sp * 4 if shared is not None else 0

    T = bh_tile if bh_tile is not None else _pick_bh_tile(
        BH, per_head, shared_bytes,
        vmem_budget_bytes=vmem_budget_bytes, min_grid_steps=min_grid_steps)
    assert BH % T == 0, "bh_tile must divide B * H"
    grid = (BH // T,)

    in_specs = [
        pl.BlockSpec((T, Q, Dk), lambda i: (i, 0, 0)),
        pl.BlockSpec((T, Dk, Sp), lambda i: (i, 0, 0)),
        pl.BlockSpec((T, Sp, Dv), lambda i: (i, 0, 0)),
    ]
    args = [q, k, v]
    if prev is not None:
        in_specs.append(pl.BlockSpec((T, Q, Sp), lambda i: (i, 0, 0)))
        args.append(prev)
    if shared is not None:
        in_specs.append(pl.BlockSpec((Q, Sp), lambda i: (0, 0)))
        args.append(shared)
    if kpm is not None:
        in_specs.append(pl.BlockSpec((T, 1, Sp), lambda i: (i, 0, 0)))
        args.append(kpm)

    out_shapes = [jax.ShapeDtypeStruct((BH, Q, Dv), out_dtype),
                  jax.ShapeDtypeStruct((BH, Q, Sp), weights_dtype)]
    out_specs = [pl.BlockSpec((T, Q, Dv), lambda i: (i, 0, 0)),
                 pl.BlockSpec((T, Q, Sp), lambda i: (i, 0, 0))]
    if emit_scores:
        out_shapes.append(jax.ShapeDtypeStruct((BH, Q, Sp), jnp.float32))
        out_specs.append(pl.BlockSpec((T, Q, Sp), lambda i: (i, 0, 0)))

    kernel = _make_kernel(scale=float(scaling_factor), s_valid=S, s_pad=Sp,
                          has_prev=prev is not None, has_shared=shared is not None,
                          has_kpm=kpm is not None, emit_scores=emit_scores)

    vmem_limit = int(min(64 * 1024 * 1024,
                         max(16 * 1024 * 1024, 2 * (T * per_head + shared_bytes))))

    results = pl.pallas_call(
        kernel,
        out_shape=tuple(out_shapes),
        grid_spec=pltpu.PrefetchScalarGridSpec(
            num_scalar_prefetch=0,
            grid=grid,
            in_specs=in_specs,
            out_specs=tuple(out_specs),
        ),
        compiler_params=pltpu.CompilerParams(
            dimension_semantics=("parallel",),
            vmem_limit_bytes=vmem_limit),
    )(*args)

    out = results[0].reshape(B, H, Q, Dv)
    weights = results[1][:, :, :S].reshape(B, H, Q, S)
    if emit_scores:
        scores = results[2][:, :, :S].reshape(B, H, Q, S)
        return out, weights, scores
    return out, weights


# ----------------------------- pure-JAX reference -----------------------------
def _reference(queries, keys, values, scale, previous_scores=None,
               key_padding_mask=None, attention_mask=None):
    scores = jnp.einsum("bhqd,bhds->bhqs",
                        queries.astype(jnp.float32), keys.astype(jnp.float32)) * scale
    if previous_scores is not None:
        scores = scores + previous_scores
    if attention_mask is not None:
        if attention_mask.dtype == jnp.bool_:
            scores = scores + jnp.where(attention_mask, MASK_VALUE, 0.0)
        else:
            scores = scores + attention_mask
    if key_padding_mask is not None:
        scores = scores + jnp.where(key_padding_mask[:, None, None, :], MASK_VALUE, 0.0)
    weights = jax.nn.softmax(scores, axis=-1)
    out = jnp.einsum("bhqs,bhsd->bhqd", weights, values.astype(jnp.float32))
    return out, weights, scores


if __name__ == "__main__":
    # Module config: model_dim=32, num_heads=4 -> head_dim=8.
    model_dim, num_heads = 32, 4
    head_dim = model_dim // num_heads
    scaling_factor = head_dim ** (-0.5)           # nn.Parameter(head_dim ** -0.5)

    B, Q, S = 2, 8, 8
    key = jax.random.PRNGKey(0)
    kq, kk, kv, kp = jax.random.split(key, 4)
    queries = jax.random.normal(kq, (B, num_heads, Q, head_dim), jnp.float32)
    keys = jax.random.normal(kk, (B, num_heads, head_dim, S), jnp.float32)
    values = jax.random.normal(kv, (B, num_heads, S, head_dim), jnp.float32)

    # ---- Test 1: plain path, f32 compute -> tight tolerance ----
    out, w = scaled_dot_product_attention(
        queries, keys, values, scaling_factor,
        residual_attention=False, compute_dtype=jnp.float32)
    out = jax.block_until_ready(out)
    w = jax.block_until_ready(w)
    ref_out, ref_w, _ = _reference(queries, keys, values, scaling_factor)
    assert jnp.allclose(out, ref_out, atol=2e-3, rtol=2e-3), "plain output mismatch"
    assert jnp.allclose(w, ref_w, atol=2e-3, rtol=2e-3), "plain weights mismatch"

    # ---- Test 2: residual attention + masks + previous scores, bf16 MXU operands ----
    previous_scores = 0.1 * jax.random.normal(kp, (B, num_heads, Q, S), jnp.float32)
    attn_mask = jnp.triu(jnp.ones((Q, S), jnp.bool_), k=1)           # causal
    key_pad = jnp.zeros((B, S), jnp.bool_).at[1, -2:].set(True)      # pad last 2 keys of batch 1

    out2, w2, sc2 = scaled_dot_product_attention(
        queries, keys, values, scaling_factor,
        previous_scores=previous_scores,
        key_padding_mask=key_pad,
        attention_mask=attn_mask,
        residual_attention=True,
        compute_dtype=jnp.bfloat16,
        weights_dtype=jnp.bfloat16)
    out2 = jax.block_until_ready(out2)
    ref_out2, ref_w2, ref_sc2 = _reference(
        queries, keys, values, scaling_factor,
        previous_scores=previous_scores,
        key_padding_mask=key_pad,
        attention_mask=attn_mask)
    TOL_BF16 = dict(atol=5e-2, rtol=5e-2)   # bf16 operand rounding vs f32 reference
    assert jnp.allclose(out2, ref_out2, **TOL_BF16), "masked output mismatch"
    assert jnp.allclose(w2.astype(jnp.float32), ref_w2, **TOL_BF16), "masked weights mismatch"
    assert jnp.allclose(sc2, ref_sc2, **TOL_BF16), "masked scores mismatch"

    print("KERNEL_OK")
</pallas_src>

<mosaic_0001>
module attributes {stable_mosaic.version = 11 : i64} {
  func.func @kernel(%arg0: i32, %arg1: memref<4x8x8xf32, #tpu.memory_space<vmem>>, %arg2: memref<4x8x128xf32, #tpu.memory_space<vmem>>, %arg3: memref<4x128x8xf32, #tpu.memory_space<vmem>>, %arg4: memref<4x8x8xf32, #tpu.memory_space<vmem>>, %arg5: memref<4x8x128xf32, #tpu.memory_space<vmem>>) attributes {dimension_semantics = [#tpu.dimension_semantics<parallel>], iteration_bounds = array<i64: 2>, scalar_prefetch = 0 : i64, scratch_operands = 0 : i64, tpu.core_type = #tpu.core_type<tc>, window_params = [{transform_indices = @transform_0, window_bounds = array<i64: 4, 8, 8>}, {transform_indices = @transform_1, window_bounds = array<i64: 4, 8, 128>}, {transform_indices = @transform_2, window_bounds = array<i64: 4, 128, 8>}, {transform_indices = @transform_3, window_bounds = array<i64: 4, 8, 8>}, {transform_indices = @transform_4, window_bounds = array<i64: 4, 8, 128>}]} {
    %c0 = arith.constant 0 : index
    %c0_0 = arith.constant 0 : index
    %c0_1 = arith.constant 0 : index
    %0 = vector.load %arg1[%c0, %c0_0, %c0_1] : memref<4x8x8xf32, #tpu.memory_space<vmem>>, vector<4x8x8xf32>
    %c0_2 = arith.constant 0 : index
    %c0_3 = arith.constant 0 : index
    %c0_4 = arith.constant 0 : index
    %1 = vector.load %arg2[%c0_2, %c0_3, %c0_4] : memref<4x8x128xf32, #tpu.memory_space<vmem>>, vector<4x8x128xf32>
    %c0_5 = arith.constant 0 : index
    %c0_6 = arith.constant 0 : index
    %c0_7 = arith.constant 0 : index
    %2 = vector.load %arg3[%c0_5, %c0_6, %c0_7] : memref<4x128x8xf32, #tpu.memory_space<vmem>>, vector<4x128x8xf32>
    "tpu.trace_start"() <{level = 10 : i32, message = "tqd,tds->tqs"}> : () -> ()
    %cst = arith.constant dense<0.000000e+00> : vector<4x8x128xf32>
    %3 = tpu.matmul %0, %1, %cst {dimension_numbers = #tpu.dot_dimension_numbers<[2], [1], [1], [2], [0, 0, 0, 1, 1, 2], [0], [0]>} : vector<4x8x8xf32>, vector<4x8x128xf32>, vector<4x8x128xf32> -> vector<4x8x128xf32>
    "tpu.trace_stop"() : () -> ()
    %cst_8 = arith.constant 0.353553385 : f32
    %4 = vector.broadcast %cst_8 : f32 to vector<4x8x128xf32>
    %5 = arith.mulf %3, %4 : vector<4x8x128xf32>
    %6 = tpu.iota {dimensions = array<i32: 2>} : vector<4x8x128xi32>
    %c8_i32 = arith.constant 8 : i32
    %7 = vector.broadcast %c8_i32 : i32 to vector<4x8x128xi32>
    %8 = arith.cmpi slt, %6, %7 : vector<4x8x128xi32>
    %cst_9 = arith.constant -1.000000e+30 : f32
    %9 = vector.broadcast %cst_9 : f32 to vector<4x8x128xf32>
    %10 = arith.select %8, %5, %9 : vector<4x8x128xi1>, vector<4x8x128xf32>
    %cst_10 = arith.constant dense<0xFF800000> : vector<4x8xf32>
    %11 = vector.multi_reduction <maximumf>, %10, %cst_10 [2] : vector<4x8x128xf32> to vector<4x8xf32>
    %12 = vector.shape_cast %11 : vector<4x8xf32> to vector<4x8x1xf32>
    %13 = vector.broadcast %12 : vector<4x8x1xf32> to vector<4x8x128xf32>
    %14 = arith.subf %10, %13 : vector<4x8x128xf32>
    %cst_11 = arith.constant -6.000000e+01 : f32
    %15 = vector.broadcast %cst_11 : f32 to vector<4x8x128xf32>
    %16 = arith.maximumf %14, %15 : vector<4x8x128xf32>
    %17 = math.exp %16 : vector<4x8x128xf32>
    %cst_12 = arith.constant dense<0.000000e+00> : vector<4x8xf32>
    %18 = vector.multi_reduction <add>, %17, %cst_12 [2] : vector<4x8x128xf32> to vector<4x8xf32>
    %19 = vector.shape_cast %18 : vector<4x8xf32> to vector<4x8x1xf32>
    %20 = tpu.reciprocal %19 {approx = true} : vector<4x8x1xf32> -> vector<4x8x1xf32>
    %21 = arith.mulf %19, %20 : vector<4x8x1xf32>
    %cst_13 = arith.constant 2.000000e+00 : f32
    %22 = vector.broadcast %cst_13 : f32 to vector<4x8x1xf32>
    %23 = arith.subf %22, %21 : vector<4x8x1xf32>
    %24 = arith.mulf %20, %23 : vector<4x8x1xf32>
    %25 = vector.broadcast %24 : vector<4x8x1xf32> to vector<4x8x128xf32>
    %26 = arith.mulf %17, %25 : vector<4x8x128xf32>
    "tpu.trace_start"() <{level = 10 : i32, message = "tqs,tsd->tqd"}> : () -> ()
    %cst_14 = arith.constant dense<0.000000e+00> : vector<4x8x8xf32>
    %27 = tpu.matmul %26, %2, %cst_14 {dimension_numbers = #tpu.dot_dimension_numbers<[2], [1], [1], [2], [0, 0, 0, 1, 1, 2], [0], [0]>} : vector<4x8x128xf32>, vector<4x128x8xf32>, vector<4x8x8xf32> -> vector<4x8x8xf32>
    "tpu.trace_stop"() : () -> ()
    %c0_15 = arith.constant 0 : index
    %c0_16 = arith.constant 0 : index
    %c0_17 = arith.constant 0 : index
    %28 = vector.load %arg4[%c0_15, %c0_16, %c0_17] : memref<4x8x8xf32, #tpu.memory_space<vmem>>, vector<4x8x8xf32>
    tpu.vector_store %arg4[%c0_15, %c0_16, %c0_17], %27 {strides = array<i32>} : memref<4x8x8xf32, #tpu.memory_space<vmem>>, vector<4x8x8xf32>,
    %c0_18 = arith.constant 0 : index
    %c0_19 = arith.constant 0 : index
    %c0_20 = arith.constant 0 : index
    %29 = vector.load %arg5[%c0_18, %c0_19, %c0_20] : memref<4x8x128xf32, #tpu.memory_space<vmem>>, vector<4x8x128xf32>
    tpu.vector_store %arg5[%c0_18, %c0_19, %c0_20], %26 {strides = array<i32>} : memref<4x8x128xf32, #tpu.memory_space<vmem>>, vector<4x8x128xf32>,
    return
  }
  func.func @transform_0(%arg0: i32) -> (i32, i32, i32) {
    %c0_i32 = arith.constant 0 : i32
    %c0_i32_0 = arith.constant 0 : i32
    %c0_i32_1 = arith.constant 0 : i32
    return %arg0, %c0_i32, %c0_i32_0 : i32, i32, i32
  }
  func.func @transform_1(%arg0: i32) -> (i32, i32, i32) {
    %c0_i32 = arith.constant 0 : i32
    %c0_i32_0 = arith.constant 0 : i32
    %c0_i32_1 = arith.constant 0 : i32
    return %arg0, %c0_i32, %c0_i32_0 : i32, i32, i32
  }
  func.func @transform_2(%arg0: i32) -> (i32, i32, i32) {
    %c0_i32 = arith.constant 0 : i32
    %c0_i32_0 = arith.constant 0 : i32
    %c0_i32_1 = arith.constant 0 : i32
    return %arg0, %c0_i32, %c0_i32_0 : i32, i32, i32
  }
  func.func @transform_3(%arg0: i32) -> (i32, i32, i32) {
    %c0_i32 = arith.constant 0 : i32
    %c0_i32_0 = arith.constant 0 : i32
    %c0_i32_1 = arith.constant 0 : i32
    return %arg0, %c0_i32, %c0_i32_0 : i32, i32, i32
  }
  func.func @transform_4(%arg0: i32) -> (i32, i32, i32) {
    %c0_i32 = arith.constant 0 : i32
    %c0_i32_0 = arith.constant 0 : i32
    %c0_i32_1 = arith.constant 0 : i32
    return %arg0, %c0_i32, %c0_i32_0 : i32, i32, i32
  }
}

</mosaic_0001>

<llo_original>
// kernel: tpu_custom_call.1
$region0: #{tpu_custom_call.1}
  #allocation0 [shape = 'u32[]', space=smem, size = 0x4, offset = 0x4, fixed_abs, tag = 'smem constant byte address 0x4 - core index']
  #allocation1 [shape = 'u32[72,128]{1,0:T(1,128)}', space=vmem, size = 0x9000, scoped, tag = 'internal scratch']
  %s0 = inlined_call_operand.vmem [shape: f32[8,8,8], index: 0, kind: input, shape index: {}]
  %s1 = inlined_call_operand.vmem [shape: f32[8,8,128], index: 1, kind: input, shape index: {}]
  %s2 = inlined_call_operand.vmem [shape: f32[8,128,8], index: 2, kind: input, shape index: {}]
  %s3 = inlined_call_operand.hbm [shape: f32[8,8,8], index: 3, kind: output, shape index: {0}]
  %s4 = inlined_call_operand.hbm [shape: f32[8,8,128], index: 4, kind: output, shape index: {1}]
  %5 = xla_tuple %s3, %s4
  %s6 = sld [smem:[#allocation0]]
  $region53: #{tpu_custom_call.1} parent=0
    _
  %s8 = ssub.s32 1, %s6
  %s9 = scalar_select 0, %s8, %s6
  $region1: #{tpu_custom_call.1} parent=0
    #allocation2 [shape = 'u8[32768]{0}', space=vmem, size = 0x8000, scoped, tag = 'output window, operand 0']
    #allocation3 [shape = 's32[2]{0}', space=sflag, size = 0x8, scoped, tag = 'scoped memory for tpu_custom_call.1']
    #allocation4 [shape = 'u8[32768]{0}', space=vmem, size = 0x8000, scoped, tag = 'output window, operand 1']
    #allocation5 [shape = 's32[2]{0}', space=sflag, size = 0x8, scoped, tag = 'scoped memory for tpu_custom_call.1']
    %10 = vsyncpa [#allocation3], 0
    %s11 = scalar_lea.sflag [#allocation3], 1
    %12 = vsyncpa %s11, 0
    %13 = vsyncpa [#allocation5], 0
    %s14 = scalar_lea.sflag [#allocation5], 1
    %15 = vsyncpa %s14, 0
    loop: start=0, step=1, limit=4
    $region2: #{tpu_custom_call.1} parent=1 // loop_pre_header
      _
    $region3: #{tpu_custom_call.1} parent=1 // loop_header
      %s17 = sphi 0, %s21
      %p18 = scmp.ge.s32.totalorder %s17, 4
      %s27 = sphi 0, %s29
      %s30 = sphi 0, %s27
      %s31 = sphi 0, %s30
      %s47 = sphi 0, %s31
      %s53 = sphi 0, %s55
      %s56 = sphi 0, %s53
      %s57 = sphi 0, %s56
      %s73 = sphi 0, %s57
      %s79 = sphi 0, %s81
      %s82 = sphi 0, %s79
      %s83 = sphi 0, %s82
      %s99 = sphi 0, %s83
      %s105 = sphi 0, %s107
      %s108 = sphi 0, %s105
      %s109 = sphi 0, %s108
      %s125 = sphi 0, %s109
      %s131 = sphi 0, %s133
      %s134 = sphi 0, %s131
      %s135 = sphi 0, %s134
      %s151 = sphi 0, %s135
    $region4: #{tpu_custom_call.1} parent=1 // loop_header_branch
      %20 = sbr.rel (%p18) target = $region8
    $region5: #{tpu_custom_call.1} parent=1 // loop_body
      %s22 = ssub.s32 %s17, 1
      %s23 = ssub.s32 %s17, 2
      %s24 = sadd.s32 %s17, 1
      %s25 = ssub.s32 %s17, %s24
      %p26 = scmp.eq.s32.totalorder %s25, 0
      %s28 = sadd.s32 %s27, 1
      %s29 = scalar_select %p26, %s27, %s28
      %p32 = pneg %p26
      %p33 = scmp.eq.s32.totalorder %s17, 1
      %p34 = por %p32, %p33
      %p35 = scmp.ne.s32.totalorder %s27, %s30
      %p36 = scmp.eq.s32.totalorder %s17, 0
      %p37 = por %p35, %p36
      %p38 = scmp.ne.s32.totalorder %s27, %s30
      %p39 = scmp.eq.s32.totalorder %s22, 1
      %p40 = por %p38, %p39
      %p41 = scmp.ne.s32.totalorder %s30, %s31
      %p42 = scmp.eq.s32.totalorder %s22, 0
      %p43 = por %p41, %p42
      %p44 = scmp.ne.s32.totalorder %s30, %s31
      %p45 = scmp.eq.s32.totalorder %s23, 1
      %p46 = por %p44, %p45
      %p48 = scmp.ne.s32.totalorder %s31, %s47
      %p49 = scmp.eq.s32.totalorder %s23, 0
      %p50 = por %p48, %p49
      %s51 = ssub.s32 %s17, %s24
      %p52 = scmp.eq.s32.totalorder %s51, 0
      %s54 = sadd.s32 %s53, 1
      %s55 = scalar_select %p52, %s53, %s54
      %p58 = pneg %p52
      %p59 = scmp.eq.s32.totalorder %s17, 1
      %p60 = por %p58, %p59
      %p61 = scmp.ne.s32.totalorder %s53, %s56
      %p62 = scmp.eq.s32.totalorder %s17, 0
      %p63 = por %p61, %p62
      %p64 = scmp.ne.s32.totalorder %s53, %s56
      %p65 = scmp.eq.s32.totalorder %s22, 1
      %p66 = por %p64, %p65
      %p67 = scmp.ne.s32.totalorder %s56, %s57
      %p68 = scmp.eq.s32.totalorder %s22, 0
      %p69 = por %p67, %p68
      %p70 = scmp.ne.s32.totalorder %s56, %s57
      %p71 = scmp.eq.s32.totalorder %s23, 1
      %p72 = por %p70, %p71
      %p74 = scmp.ne.s32.totalorder %s57, %s73
      %p75 = scmp.eq.s32.totalorder %s23, 0
      %p76 = por %p74, %p75
      %s77 = ssub.s32 %s17, %s24
      %p78 = scmp.eq.s32.totalorder %s77, 0
      %s80 = sadd.s32 %s79, 1
      %s81 = scalar_select %p78, %s79, %s80
      %p84 = pneg %p78
      %p85 = scmp.eq.s32.totalorder %s17, 1
      %p86 = por %p84, %p85
      %p87 = scmp.ne.s32.totalorder %s79, %s82
      %p88 = scmp.eq.s32.totalorder %s17, 0
      %p89 = por %p87, %p88
      %p90 = scmp.ne.s32.totalorder %s79, %s82
      %p91 = scmp.eq.s32.totalorder %s22, 1
      %p92 = por %p90, %p91
      %p93 = scmp.ne.s32.totalorder %s82, %s83
      %p94 = scmp.eq.s32.totalorder %s22, 0
      %p95 = por %p93, %p94
      %p96 = scmp.ne.s32.totalorder %s82, %s83
      %p97 = scmp.eq.s32.totalorder %s23, 1
      %p98 = por %p96, %p97
      %p100 = scmp.ne.s32.totalorder %s83, %s99
      %p101 = scmp.eq.s32.totalorder %s23, 0
      %p102 = por %p100, %p101
      %s103 = ssub.s32 %s17, %s24
      %p104 = scmp.eq.s32.totalorder %s103, 0
      %s106 = sadd.s32 %s105, 1
      %s107 = scalar_select %p104, %s105, %s106
      %p110 = pneg %p104
      %p111 = scmp.eq.s32.totalorder %s17, 1
      %p112 = por %p110, %p111
      %p113 = scmp.ne.s32.totalorder %s105, %s108
      %p114 = scmp.eq.s32.totalorder %s17, 0
      %p115 = por %p113, %p114
      %p116 = scmp.ne.s32.totalorder %s105, %s108
      %p117 = scmp.eq.s32.totalorder %s22, 1
      %p118 = por %p116, %p117
      %p119 = scmp.ne.s32.totalorder %s108, %s109
      %p120 = scmp.eq.s32.totalorder %s22, 0
      %p121 = por %p119, %p120
      %p122 = scmp.ne.s32.totalorder %s108, %s109
      %p123 = scmp.eq.s32.totalorder %s23, 1
      %p124 = por %p122, %p123
      %p126 = scmp.ne.s32.totalorder %s109, %s125
      %p127 = scmp.eq.s32.totalorder %s23, 0
      %p128 = por %p126, %p127
      %s129 = ssub.s32 %s17, %s24
      %p130 = scmp.eq.s32.totalorder %s129, 0
      %s132 = sadd.s32 %s131, 1
      %s133 = scalar_select %p130, %s131, %s132
      %p136 = pneg %p130
      %p137 = scmp.eq.s32.totalorder %s17, 1
      %p138 = por %p136, %p137
      %p139 = scmp.ne.s32.totalorder %s131, %s134
      %p140 = scmp.eq.s32.totalorder %s17, 0
      %p141 = por %p139, %p140
      %p142 = scmp.ne.s32.totalorder %s131, %s134
      %p143 = scmp.eq.s32.totalorder %s22, 1
      %p144 = por %p142, %p143
      %p145 = scmp.ne.s32.totalorder %s134, %s135
      %p146 = scmp.eq.s32.totalorder %s22, 0
      %p147 = por %p145, %p146
      %p148 = scmp.ne.s32.totalorder %s134, %s135
      %p149 = scmp.eq.s32.totalorder %s23, 1
      %p150 = por %p148, %p149
      %p152 = scmp.ne.s32.totalorder %s135, %s151
      %p153 = scmp.eq.s32.totalorder %s23, 0
      %p154 = por %p152, %p153
      %p155 = scmp.le.s32.totalorder 1, %s17
      %p156 = scmp.lt.s32.totalorder %s17, 3
      %p157 = pnand %p155, %p156
      %p158 = pneg %p157
      // Predicated region
      $region9: #{tpu_custom_call.1} parent=5 // pred_check
        _
      $region10: #{tpu_custom_call.1} parent=5 // pred_check_branch
        %160 = sbr.rel (%p157) target = $region12
      $region11: #{tpu_custom_call.1} parent=5 // pred_region
        %s161 = ssub.s32 %s17, 1
      $region12: #{tpu_custom_call.1} parent=5 // pred_fallthru
        _
      %p162 = scmp.lt.s32.totalorder %s17, 2
      // Predicated region
      $region13: #{tpu_custom_call.1} parent=5 // pred_check
        %p163 = pneg %p162
      $region14: #{tpu_custom_call.1} parent=5 // pred_check_branch
        %165 = sbr.rel (%p163) target = $region16
      $region15: #{tpu_custom_call.1} parent=5 // pred_region
        // Predicated region
        $region17: #{tpu_custom_call.1} parent=15 // pred_check
          %p166 = pneg %p37
        $region18: #{tpu_custom_call.1} parent=15 // pred_check_branch
          %168 = sbr.rel (%p166) target = $region20
        $region19: #{tpu_custom_call.1} parent=15 // pred_region
          %s169 = smul.u32 4, %s17
          %p170 = scmp.lt.s32.totalorder %s169, 7
          %s171 = scalar_select %p170, %s169, 7
          %s172 = smul.addr %s171, 8
          %s173 = scalar_lea.vmem %s0, %s172
          %s174 = smul.u32 4, %s17
        $region20: #{tpu_custom_call.1} parent=15 // pred_fallthru
          _
        // Predicated region
        $region21: #{tpu_custom_call.1} parent=15 // pred_check
          %p175 = pneg %p63
        $region22: #{tpu_custom_call.1} parent=15 // pred_check_branch
          %177 = sbr.rel (%p175) target = $region24
        $region23: #{tpu_custom_call.1} parent=15 // pred_region
          %s178 = smul.u32 4, %s17
          %p179 = scmp.lt.s32.totalorder %s178, 7
          %s180 = scalar_select %p179, %s178, 7
          %s181 = smul.addr %s180, 8
          %s182 = scalar_lea.vmem %s1, %s181
          %s183 = smul.u32 4, %s17
        $region24: #{tpu_custom_call.1} parent=15 // pred_fallthru
          _
        // Predicated region
        $region25: #{tpu_custom_call.1} parent=15 // pred_check
          %p184 = pneg %p89
        $region26: #{tpu_custom_call.1} parent=15 // pred_check_branch
          %186 = sbr.rel (%p184) target = $region28
        $region27: #{tpu_custom_call.1} parent=15 // pred_region
          %s187 = smul.u32 4, %s17
          %p188 = scmp.lt.s32.totalorder %s187, 7
          %s189 = scalar_select %p188, %s187, 7
          %s190 = smul.addr %s189, 16
          %s191 = smul.addr %s190, 8
          %s192 = scalar_lea.vmem %s2, %s191
          %s193 = smul.u32 4, %s17
        $region28: #{tpu_custom_call.1} parent=15 // pred_fallthru
          _
      $region16: #{tpu_custom_call.1} parent=5 // pred_fallthru
        _
      %p194 = scmp.le.s32.totalorder 1, %s17
      %p195 = scmp.lt.s32.totalorder %s17, 3
      %p196 = pnand %p194, %p195
      %p197 = pneg %p196
      // Predicated region
      $region29: #{tpu_custom_call.1} parent=5 // pred_check
        _
      $region30: #{tpu_custom_call.1} parent=5 // pred_check_branch
        %199 = sbr.rel (%p196) target = $region32
      $region31: #{tpu_custom_call.1} parent=5 // pred_region
        %s200 = ssub.s32 %s17, 1
        %s201 = smul.u32 4, %s22
        %p202 = scmp.lt.s32.totalorder %s201, 7
        %s203 = scalar_select %p202, %s201, 7
        %s204 = smul.addr %s203, 8
        %s205 = scalar_lea.vmem %s0, %s204
        %p206 = pneg %p43
        %p207 = pneg %p40
        %s208 = smul.u32 4, %s22
        %p209 = scmp.lt.s32.totalorder %s208, 7
        %s210 = scalar_select %p209, %s208, 7
        %s211 = smul.addr %s210, 8
        %s212 = scalar_lea.vmem %s1, %s211
        %p213 = pneg %p69
        %p214 = pneg %p66
        %s215 = smul.u32 4, %s22
        %p216 = scmp.lt.s32.totalorder %s215, 7
        %s217 = scalar_select %p216, %s215, 7
        %s218 = smul.addr %s217, 16
        %s219 = smul.addr %s218, 8
        %s220 = scalar_lea.vmem %s2, %s219
        %p221 = pneg %p95
        %p222 = pneg %p92
        %p223 = pneg %p121
        %p224 = pneg %p118
        %s225 = sand.u32 %s108, 1
        %s226 = scalar_lea.sflag [#allocation3], %s225
        %s227 = sand.u32 %s108, 1
        %s228 = smul.addr %s227, 32
        %s229 = scalar_lea.vmem [#allocation2], %s228
        %p230 = pneg %p147
        %p231 = pneg %p144
        %s232 = sand.u32 %s134, 1
        %s233 = scalar_lea.sflag [#allocation5], %s232
        %s234 = sand.u32 %s134, 1
        %s235 = smul.addr %s234, 32
        %s236 = scalar_lea.vmem [#allocation4], %s235
        %s237 = smul.u32 4, %s22
        %p238 = scmp.lt.s32.totalorder %s237, 7
        %s239 = scalar_select %p238, %s237, 7
        %s240 = smul.addr %s239, 8
        %s241 = scalar_lea.vmem %s0, %s240
        %s242 = smul.u32 4, %s22
        %s243 = smul.u32 4, %s22
        %p244 = scmp.lt.s32.totalorder %s243, 7
        %s245 = scalar_select %p244, %s243, 7
        %s246 = smul.addr %s245, 8
        %s247 = scalar_lea.vmem %s1, %s246
        %s248 = smul.u32 4, %s22
        %s249 = smul.u32 4, %s22
        %p250 = scmp.lt.s32.totalorder %s249, 7
        %s251 = scalar_select %p250, %s249, 7
        %s252 = smul.addr %s251, 16
        %s253 = smul.addr %s252, 8
        %s254 = scalar_lea.vmem %s2, %s253
        %s255 = smul.u32 4, %s22
        %s256 = smul.u32 4, %s22
        %s257 = smul.u32 4, %s22
        %v258 = vld [vmem:[%s241] sm:$0xff]
        %v259 = vld [vmem:[%s241 + $0x8] sm:$0xff]
        %v260 = vld [vmem:[%s241 + $0x10] sm:$0xff]
        %v261 = vld [vmem:[%s241 + $0x18] sm:$0xff]
        %v262 = vld [vmem:[%s247] sm:$0xff]
        %v263 = vld [vmem:[%s247 + $0x8] sm:$0xff]
        %v264 = vld [vmem:[%s247 + $0x10] sm:$0xff]
        %v265 = vld [vmem:[%s247 + $0x18] sm:$0xff]
        %v266 = vld [vmem:[%s254] sm:$0xff]
        %v267 = vld [vmem:[%s254 + $0x8] sm:$0xff]
        %v268 = vld [vmem:[%s254 + $0x10] sm:$0xff]
        %v269 = vld [vmem:[%s254 + $0x18] sm:$0xff]
        %v270 = vld [vmem:[%s254 + $0x20] sm:$0xff]
        %v271 = vld [vmem:[%s254 + $0x28] sm:$0xff]
        %v272 = vld [vmem:[%s254 + $0x30] sm:$0xff]
        %v273 = vld [vmem:[%s254 + $0x38] sm:$0xff]
        %v274 = vld [vmem:[%s254 + $0x40] sm:$0xff]
        %v275 = vld [vmem:[%s254 + $0x48] sm:$0xff]
        %v276 = vld [vmem:[%s254 + $0x50] sm:$0xff]
        %v277 = vld [vmem:[%s254 + $0x58] sm:$0xff]
        %v278 = vld [vmem:[%s254 + $0x60] sm:$0xff]
        %v279 = vld [vmem:[%s254 + $0x68] sm:$0xff]
        %v280 = vld [vmem:[%s254 + $0x70] sm:$0xff]
        %v281 = vld [vmem:[%s254 + $0x78] sm:$0xff]
        %v282 = vld [vmem:[%s254 + $0x80] sm:$0xff]
        %v283 = vld [vmem:[%s254 + $0x88] sm:$0xff]
        %v284 = vld [vmem:[%s254 + $0x90] sm:$0xff]
        %v285 = vld [vmem:[%s254 + $0x98] sm:$0xff]
        %v286 = vld [vmem:[%s254 + $0xa0] sm:$0xff]
        %v287 = vld [vmem:[%s254 + $0xa8] sm:$0xff]
        %v288 = vld [vmem:[%s254 + $0xb0] sm:$0xff]
        %v289 = vld [vmem:[%s254 + $0xb8] sm:$0xff]
        %v290 = vld [vmem:[%s254 + $0xc0] sm:$0xff]
        %v291 = vld [vmem:[%s254 + $0xc8] sm:$0xff]
        %v292 = vld [vmem:[%s254 + $0xd0] sm:$0xff]
        %v293 = vld [vmem:[%s254 + $0xd8] sm:$0xff]
        %v294 = vld [vmem:[%s254 + $0xe0] sm:$0xff]
        %v295 = vld [vmem:[%s254 + $0xe8] sm:$0xff]
        %v296 = vld [vmem:[%s254 + $0xf0] sm:$0xff]
        %v297 = vld [vmem:[%s254 + $0xf8] sm:$0xff]
        %v298 = vld [vmem:[%s254 + $0x100] sm:$0xff]
        %v299 = vld [vmem:[%s254 + $0x108] sm:$0xff]
        %v300 = vld [vmem:[%s254 + $0x110] sm:$0xff]
        %v301 = vld [vmem:[%s254 + $0x118] sm:$0xff]
        %v302 = vld [vmem:[%s254 + $0x120] sm:$0xff]
        %v303 = vld [vmem:[%s254 + $0x128] sm:$0xff]
        %v304 = vld [vmem:[%s254 + $0x130] sm:$0xff]
        %v305 = vld [vmem:[%s254 + $0x138] sm:$0xff]
        %v306 = vld [vmem:[%s254 + $0x140] sm:$0xff]
        %v307 = vld [vmem:[%s254 + $0x148] sm:$0xff]
        %v308 = vld [vmem:[%s254 + $0x150] sm:$0xff]
        %v309 = vld [vmem:[%s254 + $0x158] sm:$0xff]
        %v310 = vld [vmem:[%s254 + $0x160] sm:$0xff]
        %v311 = vld [vmem:[%s254 + $0x168] sm:$0xff]
        %v312 = vld [vmem:[%s254 + $0x170] sm:$0xff]
        %v313 = vld [vmem:[%s254 + $0x178] sm:$0xff]
        %v314 = vld [vmem:[%s254 + $0x180] sm:$0xff]
        %v315 = vld [vmem:[%s254 + $0x188] sm:$0xff]
        %v316 = vld [vmem:[%s254 + $0x190] sm:$0xff]
        %v317 = vld [vmem:[%s254 + $0x198] sm:$0xff]
        %v318 = vld [vmem:[%s254 + $0x1a0] sm:$0xff]
        %v319 = vld [vmem:[%s254 + $0x1a8] sm:$0xff]
        %v320 = vld [vmem:[%s254 + $0x1b0] sm:$0xff]
        %v321 = vld [vmem:[%s254 + $0x1b8] sm:$0xff]
        %v322 = vld [vmem:[%s254 + $0x1c0] sm:$0xff]
        %v323 = vld [vmem:[%s254 + $0x1c8] sm:$0xff]
        %v324 = vld [vmem:[%s254 + $0x1d0] sm:$0xff]
        %v325 = vld [vmem:[%s254 + $0x1d8] sm:$0xff]
        %v326 = vld [vmem:[%s254 + $0x1e0] sm:$0xff]
        %v327 = vld [vmem:[%s254 + $0x1e8] sm:$0xff]
        %v328 = vld [vmem:[%s254 + $0x1f0] sm:$0xff]
        %v329 = vld [vmem:[%s254 + $0x1f8] sm:$0xff]
        %vm330 = vcmask 64512
        %v332 = vsel %vm330, %v258, 0
        %334 = vmatpush.msra.mxu0 0.0
        %335 = vmatpush.msra.mxu0 0.0
        %336 = vmatpush.msra.mxu0 0.0
        %337 = vmatpush.msra.mxu0 0.0
        %338 = vmatpush.msra.mxu0 0.0
        %339 = vmatpush.msra.mxu0 0.0
        %340 = vmatpush.msra.mxu0 0.0
        %341 = vmatpush.msra.mxu0 0.0
        %342 = vmatpush.msra.mxu0 0.0
        %343 = vmatpush.msra.mxu0 0.0
        %344 = vmatpush.msra.mxu0 0.0
        %345 = vmatpush.msra.mxu0 0.0
        %346 = vmatpush.msra.mxu0 0.0
        %347 = vmatpush.msra.mxu0 0.0
        %348 = vmatpush.msra.mxu0 0.0
        %349 = vmatpush.msra.mxu0 %v262
        %350 = vmatmul.f32.gmra.mxu0 %v332
        %v351 = vpop.f32.mrf.mxu0
        %v352 = vadd.f32 0.0, %v351
        %353 = vdwg.mxu0
        %v355 = vsel %vm330, %v259, 0
        %357 = vmatpush.msra.mxu0 0.0
        %358 = vmatpush.msra.mxu0 0.0
        %359 = vmatpush.msra.mxu0 0.0
        %360 = vmatpush.msra.mxu0 0.0
        %361 = vmatpush.msra.mxu0 0.0
        %362 = vmatpush.msra.mxu0 0.0
        %363 = vmatpush.msra.mxu0 0.0
        %364 = vmatpush.msra.mxu0 0.0
        %365 = vmatpush.msra.mxu0 0.0
        %366 = vmatpush.msra.mxu0 0.0
        %367 = vmatpush.msra.mxu0 0.0
        %368 = vmatpush.msra.mxu0 0.0
        %369 = vmatpush.msra.mxu0 0.0
        %370 = vmatpush.msra.mxu0 0.0
        %371 = vmatpush.msra.mxu0 0.0
        %372 = vmatpush.msra.mxu0 %v263
        %373 = vmatmul.f32.gmra.mxu0 %v355
        %v374 = vpop.f32.mrf.mxu0
        %v375 = vadd.f32 0.0, %v374
        %376 = vdwg.mxu0
        %v378 = vsel %vm330, %v260, 0
        %380 = vmatpush.msra.mxu0 0.0
        %381 = vmatpush.msra.mxu0 0.0
        %382 = vmatpush.msra.mxu0 0.0
        %383 = vmatpush.msra.mxu0 0.0
        %384 = vmatpush.msra.mxu0 0.0
        %385 = vmatpush.msra.mxu0 0.0
        %386 = vmatpush.msra.mxu0 0.0
        %387 = vmatpush.msra.mxu0 0.0
        %388 = vmatpush.msra.mxu0 0.0
        %389 = vmatpush.msra.mxu0 0.0
        %390 = vmatpush.msra.mxu0 0.0
        %391 = vmatpush.msra.mxu0 0.0
        %392 = vmatpush.msra.mxu0 0.0
        %393 = vmatpush.msra.mxu0 0.0
        %394 = vmatpush.msra.mxu0 0.0
        %395 = vmatpush.msra.mxu0 %v264
        %396 = vmatmul.f32.gmra.mxu0 %v378
        %v397 = vpop.f32.mrf.mxu0
        %v398 = vadd.f32 0.0, %v397
        %399 = vdwg.mxu0
        %v401 = vsel %vm330, %v261, 0
        %403 = vmatpush.msra.mxu0 0.0
        %404 = vmatpush.msra.mxu0 0.0
        %405 = vmatpush.msra.mxu0 0.0
        %406 = vmatpush.msra.mxu0 0.0
        %407 = vmatpush.msra.mxu0 0.0
        %408 = vmatpush.msra.mxu0 0.0
        %409 = vmatpush.msra.mxu0 0.0
        %410 = vmatpush.msra.mxu0 0.0
        %411 = vmatpush.msra.mxu0 0.0
        %412 = vmatpush.msra.mxu0 0.0
        %413 = vmatpush.msra.mxu0 0.0
        %414 = vmatpush.msra.mxu0 0.0
        %415 = vmatpush.msra.mxu0 0.0
        %416 = vmatpush.msra.mxu0 0.0
        %417 = vmatpush.msra.mxu0 0.0
        %418 = vmatpush.msra.mxu0 %v265
        %419 = vmatmul.f32.gmra.mxu0 %v401
        %v420 = vpop.f32.mrf.mxu0
        %v421 = vadd.f32 0.0, %v420
        %422 = vdwg.mxu0
        %v423 = vmul.f32 %v352, 0.35355338
        %v424 = vmul.f32 %v375, 0.35355338
        %v425 = vmul.f32 %v398, 0.35355338
        %v426 = vmul.f32 %v421, 0.35355338
        %v427 = vlaneseq
        %v428 = vand.u32 %v427, 127
        %vm429 = vcmp.lt.s32.totalorder %v428, 8
        %v430 = vsel %vm429, %v423, -1e+30
        %v431 = vsel %vm429, %v424, -1e+30
        %v432 = vsel %vm429, %v425, -1e+30
        %v433 = vsel %vm429, %v426, -1e+30
        %434 = vmax.xlane.f32.xlu0 %v430
        %v435 = vpop.xlane.xlu0 %434
        %436 = vmax.xlane.f32.xlu0 %v431
        %v437 = vpop.xlane.xlu0 %436
        %438 = vmax.xlane.f32.xlu0 %v432
        %v439 = vpop.xlane.xlu0 %438
        %440 = vmax.xlane.f32.xlu0 %v433
        %v441 = vpop.xlane.xlu0 %440
        %v442 = vsub.f32 %v430, %v435
        %v443 = vsub.f32 %v431, %v437
        %v444 = vsub.f32 %v432, %v439
        %v445 = vsub.f32 %v433, %v441
        %v446 = vmax.f32 %v442, -60.0
        %v447 = vmax.f32 %v443, -60.0
        %v448 = vmax.f32 %v444, -60.0
        %v449 = vmax.f32 %v445, -60.0
        %v450 = vmul.f32 %v446, 1.442695
        %v451 = vpow.pop %v450
        %v452 = vmul.f32 %v447, 1.442695
        %v453 = vpow.pop %v452
        %v454 = vmul.f32 %v448, 1.442695
        %v455 = vpow.pop %v454
        %v456 = vmul.f32 %v449, 1.442695
        %v457 = vpow.pop %v456
        %458 = vadd.xlane.f32.xlu0 %v451
        %v459 = vpop.xlane.xlu0 %458
        %460 = vadd.xlane.f32.xlu0 %v453
        %v461 = vpop.xlane.xlu0 %460
        %462 = vadd.xlane.f32.xlu0 %v455
        %v463 = vpop.xlane.xlu0 %462
        %464 = vadd.xlane.f32.xlu0 %v457
        %v465 = vpop.xlane.xlu0 %464
        %v466 = vrcp.pop %v459
        %v467 = vrcp.pop %v461
        %v468 = vrcp.pop %v463
        %v469 = vrcp.pop %v465
        %v470 = vmul.f32 %v459, %v466
        %v471 = vmul.f32 %v461, %v467
        %v472 = vmul.f32 %v463, %v468
        %v473 = vmul.f32 %v465, %v469
        %v474 = vsub.f32 2.0, %v470
        %v475 = vsub.f32 2.0, %v471
        %v476 = vsub.f32 2.0, %v472
        %v477 = vsub.f32 2.0, %v473
        %v478 = vmul.f32 %v466, %v474
        %v479 = vmul.f32 %v467, %v475
        %v480 = vmul.f32 %v468, %v476
        %v481 = vmul.f32 %v469, %v477
        %v482 = vmul.f32 %v451, %v478
        %v483 = vmul.f32 %v453, %v479
        %v484 = vmul.f32 %v455, %v480
        %v485 = vmul.f32 %v457, %v481
        %486 = vmatpush.msra.mxu0 %v281
        %487 = vmatpush.msra.mxu0 %v280
        %488 = vmatpush.msra.mxu0 %v279
        %489 = vmatpush.msra.mxu0 %v278
        %490 = vmatpush.msra.mxu0 %v277
        %491 = vmatpush.msra.mxu0 %v276
        %492 = vmatpush.msra.mxu0 %v275
        %493 = vmatpush.msra.mxu0 %v274
        %494 = vmatpush.msra.mxu0 %v273
        %495 = vmatpush.msra.mxu0 %v272
        %496 = vmatpush.msra.mxu0 %v271
        %497 = vmatpush.msra.mxu0 %v270
        %498 = vmatpush.msra.mxu0 %v269
        %499 = vmatpush.msra.mxu0 %v268
        %500 = vmatpush.msra.mxu0 %v267
        %501 = vmatpush.msra.mxu0 %v266
        %502 = vmatmul.f32.gmra.mxu0 %v482
        %v503 = vpop.f32.mrf.mxu0
        %v504 = vadd.f32 0.0, %v503
        %505 = vdwg.mxu0
        %506 = vmatpush.msra.mxu0 %v297
        %507 = vmatpush.msra.mxu0 %v296
        %508 = vmatpush.msra.mxu0 %v295
        %509 = vmatpush.msra.mxu0 %v294
        %510 = vmatpush.msra.mxu0 %v293
        %511 = vmatpush.msra.mxu0 %v292
        %512 = vmatpush.msra.mxu0 %v291
        %513 = vmatpush.msra.mxu0 %v290
        %514 = vmatpush.msra.mxu0 %v289
        %515 = vmatpush.msra.mxu0 %v288
        %516 = vmatpush.msra.mxu0 %v287
        %517 = vmatpush.msra.mxu0 %v286
        %518 = vmatpush.msra.mxu0 %v285
        %519 = vmatpush.msra.mxu0 %v284
        %520 = vmatpush.msra.mxu0 %v283
        %521 = vmatpush.msra.mxu0 %v282
        %522 = vmatmul.f32.gmra.mxu0 %v483
        %v523 = vpop.f32.mrf.mxu0
        %v524 = vadd.f32 0.0, %v523
        %525 = vdwg.mxu0
        %526 = vmatpush.msra.mxu0 %v313
        %527 = vmatpush.msra.mxu0 %v312
        %528 = vmatpush.msra.mxu0 %v311
        %529 = vmatpush.msra.mxu0 %v310
        %530 = vmatpush.msra.mxu0 %v309
        %531 = vmatpush.msra.mxu0 %v308
        %532 = vmatpush.msra.mxu0 %v307
        %533 = vmatpush.msra.mxu0 %v306
        %534 = vmatpush.msra.mxu0 %v305
        %535 = vmatpush.msra.mxu0 %v304
        %536 = vmatpush.msra.mxu0 %v303
        %537 = vmatpush.msra.mxu0 %v302
        %538 = vmatpush.msra.mxu0 %v301
        %539 = vmatpush.msra.mxu0 %v300
        %540 = vmatpush.msra.mxu0 %v299
        %541 = vmatpush.msra.mxu0 %v298
        %542 = vmatmul.f32.gmra.mxu0 %v484
        %v543 = vpop.f32.mrf.mxu0
        %v544 = vadd.f32 0.0, %v543
        %545 = vdwg.mxu0
        %546 = vmatpush.msra.mxu0 %v329
        %547 = vmatpush.msra.mxu0 %v328
        %548 = vmatpush.msra.mxu0 %v327
        %549 = vmatpush.msra.mxu0 %v326
        %550 = vmatpush.msra.mxu0 %v325
        %551 = vmatpush.msra.mxu0 %v324
        %552 = vmatpush.msra.mxu0 %v323
        %553 = vmatpush.msra.mxu0 %v322
        %554 = vmatpush.msra.mxu0 %v321
        %555 = vmatpush.msra.mxu0 %v320
        %556 = vmatpush.msra.mxu0 %v319
        %557 = vmatpush.msra.mxu0 %v318
        %558 = vmatpush.msra.mxu0 %v317
        %559 = vmatpush.msra.mxu0 %v316
        %560 = vmatpush.msra.mxu0 %v315
        %561 = vmatpush.msra.mxu0 %v314
        %562 = vmatmul.f32.gmra.mxu0 %v485
        %v563 = vpop.f32.mrf.mxu0
        %v564 = vadd.f32 0.0, %v563
        %565 = vdwg.mxu0
        %566 = vst.msk [vmem:[%s229] sm:$0xff] %vm330, %v504
        %567 = vst.msk [vmem:[%s229 + $0x8] sm:$0xff] %vm330, %v524
        %568 = vst.msk [vmem:[%s229 + $0x10] sm:$0xff] %vm330, %v544
        %569 = vst.msk [vmem:[%s229 + $0x18] sm:$0xff] %vm330, %v564
        %570 = vst [vmem:[%s236] sm:$0xff] %v482
        %571 = vst [vmem:[%s236 + $0x8] sm:$0xff] %v483
        %572 = vst [vmem:[%s236 + $0x10] sm:$0xff] %v484
        %573 = vst [vmem:[%s236 + $0x18] sm:$0xff] %v485
        %s574 = sand.u32 %s108, 1
        %s575 = scalar_lea.sflag [#allocation3], %s574
        %s576 = sand.u32 %s108, 1
        %s577 = smul.addr %s576, 32
        %s578 = scalar_lea.vmem [#allocation2], %s577
        %s579 = sand.u32 %s134, 1
        %s580 = scalar_lea.sflag [#allocation5], %s579
        %s581 = sand.u32 %s134, 1
        %s582 = smul.addr %s581, 32
        %s583 = scalar_lea.vmem [#allocation4], %s582
        // Predicated region
        $region33: #{tpu_custom_call.1} parent=31 // pred_check
          %p584 = pneg %p118
        $region34: #{tpu_custom_call.1} parent=31 // pred_check_branch
          %586 = sbr.rel (%p584) target = $region36
        $region35: #{tpu_custom_call.1} parent=31 // pred_region
          %s587 = smul.u32 4, %s22
          %589 = vsyncadd %s575, 0
          %s590 = smul.addr %s587, 8
          %s591 = scalar_lea.hbm %s3, %s590
          %s592 = sshll.u32 %s578, 4
          %s593 = int_to_ptr.vmem [resolvable:$true] %s592
          %s594 = sshll.u32 %s591, 4
          %s595 = int_to_ptr.hbm [resolvable:$true] %s594
          %600 = dma.vmem_to_hbm [thread:$0]  %s593, 512, %s595, %s575, 128, 128, 8
        $region36: #{tpu_custom_call.1} parent=31 // pred_fallthru
          _
        // Predicated region
        $region37: #{tpu_custom_call.1} parent=31 // pred_check
          %p601 = pneg %p144
        $region38: #{tpu_custom_call.1} parent=31 // pred_check_branch
          %603 = sbr.rel (%p601) target = $region40
        $region39: #{tpu_custom_call.1} parent=31 // pred_region
          %s604 = smul.u32 4, %s22
          %606 = vsyncadd %s580, 0
          %s607 = smul.addr %s604, 8
          %s608 = scalar_lea.hbm %s4, %s607
          %s609 = sshll.u32 %s583, 4
          %s610 = int_to_ptr.vmem [resolvable:$true] %s609
          %s611 = sshll.u32 %s608, 4
          %s612 = int_to_ptr.hbm [resolvable:$true] %s611
          %617 = dma.vmem_to_hbm [thread:$0]  %s610, 512, %s612, %s580, 128, 128, 8
        $region40: #{tpu_custom_call.1} parent=31 // pred_fallthru
          _
      $region32: #{tpu_custom_call.1} parent=5 // pred_fallthru
        _
      %p618 = scmp.le.s32.totalorder 2, %s17
      // Predicated region
      $region41: #{tpu_custom_call.1} parent=5 // pred_check
        %p619 = pneg %p618
      $region42: #{tpu_custom_call.1} parent=5 // pred_check_branch
        %621 = sbr.rel (%p619) target = $region44
      $region43: #{tpu_custom_call.1} parent=5 // pred_region
        %s622 = ssub.s32 %s17, 2
        // Predicated region
        $region45: #{tpu_custom_call.1} parent=43 // pred_check
          %p623 = pneg %p124
        $region46: #{tpu_custom_call.1} parent=43 // pred_check_branch
          %625 = sbr.rel (%p623) target = $region48
        $region47: #{tpu_custom_call.1} parent=43 // pred_region
          %s626 = sand.u32 %s109, 1
          %s627 = scalar_lea.sflag [#allocation3], %s626
          %s628 = sand.u32 %s109, 1
          %s629 = smul.addr %s628, 32
          %s630 = scalar_lea.vmem [#allocation2], %s629
          %632 = dma.done %s627, 512
        $region48: #{tpu_custom_call.1} parent=43 // pred_fallthru
          _
        // Predicated region
        $region49: #{tpu_custom_call.1} parent=43 // pred_check
          %p633 = pneg %p150
        $region50: #{tpu_custom_call.1} parent=43 // pred_check_branch
          %635 = sbr.rel (%p633) target = $region52
        $region51: #{tpu_custom_call.1} parent=43 // pred_region
          %s636 = sand.u32 %s135, 1
          %s637 = scalar_lea.sflag [#allocation5], %s636
          %s638 = sand.u32 %s135, 1
          %s639 = smul.addr %s638, 32
          %s640 = scalar_lea.vmem [#allocation4], %s639
          %642 = dma.done %s637, 512
        $region52: #{tpu_custom_call.1} parent=43 // pred_fallthru
          _
      $region44: #{tpu_custom_call.1} parent=5 // pred_fallthru
        _
    $region6: #{tpu_custom_call.1} parent=1 // loop_footer
      %s21 = sadd.s32 1, %s17
    $region7: #{tpu_custom_call.1} parent=1 // loop_footer_branch
      %16 = sbr.rel target = $region3
    $region8: #{tpu_custom_call.1} parent=1 // loop_exit
      _
    %643 = vsyncpa [#allocation3], 1
    %s644 = scalar_lea.sflag [#allocation3], 1
    %645 = vsyncpa %s644, 1
    %646 = vsyncpa [#allocation5], 1
    %s647 = scalar_lea.sflag [#allocation5], 1
    %648 = vsyncpa %s647, 1

</llo_original>
